<compile_context>
chip_gen: v6e
topology: v6e:2x2x1
jax: 0.10.0
libtpu: 0.0.40
codegen_flags: <defaults>
</compile_context>

<pallas_src>
import jax
import jax.numpy as jnp
from jax import lax
from jax.experimental import pallas as pl
from jax.experimental.pallas import tpu as pltpu


def _round_up(a, m):
    return (a + m - 1) // m * m


def scale_prediction_forward(x_nchw, w1, bn_gamma, bn_beta, bn_mean, bn_var,
                             w2, b2, num_anchors=3, eps=1e-5,
                             compute_dtype=jnp.bfloat16):
    """Fused ScalePrediction head: 3x3 Conv + BN + LeakyReLU(0.1) + 1x1 Conv.

    Returns the PyTorch layout (B, num_anchors, H, W, num_outputs).
    """
    B, Cin, H, W = x_nchw.shape
    Cmid = w1.shape[0]
    Cout = w2.shape[0]
    num_outputs = Cout // num_anchors
    cdt = jnp.dtype(compute_dtype)
    out_dtype = x_nchw.dtype

    LANE = 128
    Cin_p = _round_up(Cin, 8)            # sublane-aligned channel count
    Cmid_p = _round_up(Cmid, 8)
    K = 9 * Cin_p                        # contraction dim of fused 3x3 matmul
    HW = H * W

    # ---- lane tiling: largest 128-aligned tile within a VMEM budget --------
    cbytes = cdt.itemsize
    obytes = jnp.dtype(out_dtype).itemsize
    per_lane = (K * cbytes               # patch scratch
                + Cmid_p * 4             # f32 intermediate h
                + 2 * Cout * obytes      # double-buffered output tile
                + 2 * 2 * cbytes)        # double-buffered column mask
    tile_budget = 24 * 1024 * 1024       # conservative (v7x: 64 MiB physical VMEM)
    tile_cap = max(LANE, min(4096, (tile_budget // per_lane) // LANE * LANE))
    Np = _round_up(HW, LANE)
    if Np <= tile_cap:
        tile_n = Np
    else:
        tile_n = tile_cap
        Np = _round_up(HW, tile_n)
    n_tiles = Np // tile_n

    # Row-padded flattened length: +1 leading element so every tap offset is
    # non-negative, trailing pad so every (start, tile_n) slice is in bounds.
    L = _round_up(Np + 2 * W + 2, LANE)

    # ---- wrapper-side prep (cheap, fusible XLA ops; no im2col) -------------
    # Fold eval-mode BatchNorm into the 3x3 conv.
    scale = bn_gamma / jnp.sqrt(bn_var + eps)                       # (Cmid,)
    bias1 = bn_beta - bn_mean * scale                               # (Cmid,)
    w1s = w1 * scale[:, None, None, None]                           # (Cmid,Cin,3,3)
    # Tap-major, channel-minor flattening: column t*Cin_p + c, t = ky*3 + kx.
    w1t = jnp.transpose(w1s, (0, 2, 3, 1))                          # (Cmid,3,3,Cin)
    w1t = jnp.pad(w1t, ((0, Cmid_p - Cmid), (0, 0), (0, 0), (0, Cin_p - Cin)))
    w1_flat = w1t.reshape(Cmid_p, K).astype(cdt)
    b1_col = jnp.pad(bias1, (0, Cmid_p - Cmid)).reshape(Cmid_p, 1).astype(jnp.float32)
    w2_flat = jnp.pad(w2[:, :, 0, 0], ((0, 0), (0, Cmid_p - Cmid))).astype(cdt)
    b2_col = b2.reshape(Cout, 1).astype(jnp.float32)

    # Input: zero-pad rows only (H -> H+2), flatten rows, pad channels to
    # Cin_p, add 1 leading + trailing elements, cast to the compute dtype.
    row_len = (H + 2) * W
    xp = jnp.pad(x_nchw, ((0, 0), (0, 0), (1, 1), (0, 0)))           # (B,Cin,H+2,W)
    xp = xp.reshape(B, Cin, row_len)
    xp = jnp.pad(xp, ((0, 0), (0, Cin_p - Cin), (1, L - 1 - row_len))).astype(cdt)

    # Column-validity masks: after flattening, the left/right taps read the
    # neighbouring row's edge pixel at col 0 / W-1, so those must be zeroed.
    pcol = jnp.arange(Np, dtype=jnp.int32) % W
    colmask = jnp.stack([(pcol >= 1), (pcol <= W - 2)]).astype(cdt)  # (2, Np)

    # ---- kernel -------------------------------------------------------------
    def kernel(mask_ref, x_ref, w1_ref, b1_ref, w2_ref, b2_ref, o_ref, p_ref):
        # mask_ref: (2, tile_n)      column validity (compute dtype, 0/1)
        # x_ref   : (Cin_p, L)       row-padded flattened slab (whole image)
        # w1_ref  : (Cmid_p, K)      BN-folded 3x3 weight, tap-major columns
        # b1_ref  : (Cmid_p, 1) f32  folded BN bias
        # w2_ref  : (Cout, Cmid_p)   1x1 conv weight
        # b2_ref  : (Cout, 1) f32    1x1 conv bias
        # o_ref   : (Cout, tile_n)
        # p_ref   : (K, tile_n)      VMEM scratch: assembled patch block
        if n_tiles > 1:
            base = pl.multiple_of(pl.program_id(1) * tile_n, LANE)
        else:
            base = 0                                   # fully static slices
        for t in range(9):
            dy, dx = divmod(t, 3)
            start = base + dy * W + dx
            v = x_ref[:, pl.ds(start, tile_n)]         # (Cin_p, tile_n)
            if dx == 0:
                v = v * mask_ref[0:1, :]
            elif dx == 2:
                v = v * mask_ref[1:2, :]
            p_ref[t * Cin_p:(t + 1) * Cin_p, :] = v
        # Single K = 9*Cin_p MXU matmul, f32 accumulation.
        h = jnp.dot(w1_ref[...], p_ref[...], preferred_element_type=jnp.float32)
        h = h + b1_ref[...]
        h = jnp.where(h > 0, h, 0.1 * h)               # LeakyReLU(0.1), f32 VPU
        out = jnp.dot(w2_ref[...], h.astype(w2_ref.dtype),
                      preferred_element_type=jnp.float32) + b2_ref[...]
        o_ref[...] = out.astype(o_ref.dtype)

    # ---- VMEM budget / cost estimate ----------------------------------------
    est_vmem = (2 * Cin_p * L * cbytes                       # x slab (2 buffers)
                + 2 * (Cmid_p * K + Cout * Cmid_p) * cbytes  # weights (2 buffers)
                + 4 * (Cmid_p + Cout) * 4                    # biases
                + 2 * 2 * tile_n * cbytes                    # column mask
                + K * tile_n * cbytes                        # patch scratch
                + Cmid_p * tile_n * 4                        # f32 intermediate
                + 2 * Cout * tile_n * obytes)                # output (2 buffers)
    vmem_limit = int(min(60 * 2 ** 20, max(32 * 2 ** 20, 2 * est_vmem)))

    flops = 2 * B * Np * (K * Cmid_p + Cmid_p * Cout)
    bytes_accessed = int(B * Cin_p * L * cbytes
                         + (Cmid_p * K + Cout * Cmid_p + 2 * Np) * cbytes
                         + B * Cout * Np * obytes)
    cost = pl.CostEstimate(flops=int(flops), transcendentals=0,
                           bytes_accessed=bytes_accessed)

    out_flat = pl.pallas_call(
        kernel,
        out_shape=jax.ShapeDtypeStruct((B, Cout, Np), out_dtype),
        grid_spec=pltpu.PrefetchScalarGridSpec(
            num_scalar_prefetch=0,
            grid=(B, n_tiles),
            in_specs=[
                pl.BlockSpec((2, tile_n), lambda b, n: (0, n)),
                # Whole row-padded slab per batch element; its block index is
                # invariant in n, so the pipeline only re-copies it when b
                # changes.  Weight/bias blocks below are fully grid-invariant
                # (could additionally be single-buffered via pl.Buffered(1)).
                pl.BlockSpec((None, Cin_p, L), lambda b, n: (b, 0, 0)),
                pl.BlockSpec((Cmid_p, K), lambda b, n: (0, 0)),
                pl.BlockSpec((Cmid_p, 1), lambda b, n: (0, 0)),
                pl.BlockSpec((Cout, Cmid_p), lambda b, n: (0, 0)),
                pl.BlockSpec((Cout, 1), lambda b, n: (0, 0)),
            ],
            out_specs=pl.BlockSpec((None, Cout, tile_n), lambda b, n: (b, 0, n)),
            scratch_shapes=[pltpu.VMEM((K, tile_n), cdt)],
        ),
        compiler_params=pltpu.CompilerParams(
            dimension_semantics=("parallel", "parallel"),
            vmem_limit_bytes=vmem_limit),
        cost_estimate=cost,
    )(colmask, xp, w1_flat, b1_col, w2_flat, b2_col)

    # (B, Cout, Np) -> (B, Cout, HW) -> PyTorch (B, A, H, W, num_outputs).
    y = out_flat[:, :, :HW].reshape(B, num_anchors, num_outputs, H, W)
    return jnp.transpose(y, (0, 1, 3, 4, 2))


def _reference(x_nchw, w1, bn_gamma, bn_beta, bn_mean, bn_var, w2, b2,
               num_anchors=3, eps=1e-5):
    # Pure-JAX reference of the same forward pass (eval-mode BN).
    y = lax.conv_general_dilated(
        x_nchw, w1, window_strides=(1, 1), padding="SAME",
        dimension_numbers=("NCHW", "OIHW", "NCHW"))
    s = (bn_gamma / jnp.sqrt(bn_var + eps)).reshape(1, -1, 1, 1)
    t = (bn_beta - bn_mean * bn_gamma / jnp.sqrt(bn_var + eps)).reshape(1, -1, 1, 1)
    y = y * s + t
    y = jnp.where(y > 0, y, 0.1 * y)
    y = lax.conv_general_dilated(
        y, w2, window_strides=(1, 1), padding="VALID",
        dimension_numbers=("NCHW", "OIHW", "NCHW")) + b2.reshape(1, -1, 1, 1)
    B, C, H, W = y.shape
    num_outputs = C // num_anchors
    return jnp.transpose(y.reshape(B, num_anchors, num_outputs, H, W),
                         (0, 1, 3, 4, 2))


if __name__ == "__main__":
    B, Cin, H, W = 2, 4, 16, 16
    num_classes = 3
    num_anchors = 3
    num_outputs = num_classes + 5
    Cmid = 2 * Cin
    Cout = num_anchors * num_outputs

    key = jax.random.PRNGKey(0)
    k1, k2, k3, k4, k5, k6, k7 = jax.random.split(key, 7)
    x = jax.random.normal(k1, (B, Cin, H, W), jnp.float32)
    w1 = 0.1 * jax.random.normal(k2, (Cmid, Cin, 3, 3), jnp.float32)
    bn_gamma = 1.0 + 0.1 * jax.random.normal(k3, (Cmid,), jnp.float32)
    bn_beta = 0.1 * jax.random.normal(k4, (Cmid,), jnp.float32)
    bn_mean = 0.05 * jax.random.normal(k5, (Cmid,), jnp.float32)
    bn_var = jnp.abs(1.0 + 0.1 * jax.random.normal(k6, (Cmid,), jnp.float32))
    w2 = 0.1 * jax.random.normal(k7, (Cout, Cmid, 1, 1), jnp.float32)
    b2 = 0.01 * jnp.arange(Cout, dtype=jnp.float32)

    ref = _reference(x, w1, bn_gamma, bn_beta, bn_mean, bn_var, w2, b2,
                     num_anchors=num_anchors)

    # f32 compute path: checks exactness of the fused in-kernel im2col + BN fold.
    out_f32 = scale_prediction_forward(x, w1, bn_gamma, bn_beta, bn_mean, bn_var,
                                       w2, b2, num_anchors=num_anchors,
                                       compute_dtype=jnp.float32)
    out_f32 = jax.block_until_ready(out_f32)
    assert out_f32.shape == (B, num_anchors, H, W, num_outputs), out_f32.shape
    assert jnp.allclose(out_f32, ref, atol=1e-4, rtol=1e-4), "f32 mismatch vs reference"

    # bf16 compute path (default / production): halved HBM bytes, f32 accumulation.
    out_bf16 = scale_prediction_forward(x, w1, bn_gamma, bn_beta, bn_mean, bn_var,
                                        w2, b2, num_anchors=num_anchors,
                                        compute_dtype=jnp.bfloat16)
    out_bf16 = jax.block_until_ready(out_bf16)
    assert out_bf16.shape == (B, num_anchors, H, W, num_outputs), out_bf16.shape
    assert jnp.allclose(out_bf16, ref, atol=3e-2, rtol=3e-2), "bf16 mismatch vs reference"

    print("KERNEL_OK")
</pallas_src>

<mosaic_0001>
module attributes {stable_mosaic.version = 11 : i64} {
  func.func @kernel(%arg0: i32, %arg1: i32, %arg2: memref<2x256xf32, #tpu.memory_space<vmem>>, %arg3: memref<1x8x384xf32, #tpu.memory_space<vmem>>, %arg4: memref<8x72xf32, #tpu.memory_space<vmem>>, %arg5: memref<8x1xf32, #tpu.memory_space<vmem>>, %arg6: memref<24x8xf32, #tpu.memory_space<vmem>>, %arg7: memref<24x1xf32, #tpu.memory_space<vmem>>, %arg8: memref<1x24x256xf32, #tpu.memory_space<vmem>>, %arg9: memref<72x256xf32, #tpu.memory_space<vmem>>) attributes {dimension_semantics = [#tpu.dimension_semantics<parallel>, #tpu.dimension_semantics<parallel>], iteration_bounds = array<i64: 2, 1>, scalar_prefetch = 0 : i64, scratch_operands = 1 : i64, tpu.core_type = #tpu.core_type<tc>, window_params = [{transform_indices = @transform_0, window_bounds = array<i64: 2, 256>}, {transform_indices = @transform_1, window_bounds = array<i64: 1, 8, 384>}, {pipeline_mode = #tpu.pipeline_mode<synchronous>, transform_indices = @transform_2, window_bounds = array<i64: 8, 72>}, {pipeline_mode = #tpu.pipeline_mode<synchronous>, transform_indices = @transform_3, window_bounds = array<i64: 8, 1>}, {pipeline_mode = #tpu.pipeline_mode<synchronous>, transform_indices = @transform_4, window_bounds = array<i64: 24, 8>}, {pipeline_mode = #tpu.pipeline_mode<synchronous>, transform_indices = @transform_5, window_bounds = array<i64: 24, 1>}, {transform_indices = @transform_6, window_bounds = array<i64: 1, 24, 256>}]} {
    %c0 = arith.constant 0 : index
    %c0_0 = arith.constant 0 : index
    %c0_1 = arith.constant 0 : index
    %0 = vector.load %arg3[%c0, %c0_0, %c0_1] : memref<1x8x384xf32, #tpu.memory_space<vmem>>, vector<1x8x256xf32>
    %1 = vector.shape_cast %0 : vector<1x8x256xf32> to vector<8x256xf32>
    %c0_2 = arith.constant 0 : index
    %c0_3 = arith.constant 0 : index
    %2 = vector.load %arg2[%c0_2, %c0_3] : memref<2x256xf32, #tpu.memory_space<vmem>>, vector<1x256xf32>
    %3 = vector.broadcast %2 : vector<1x256xf32> to vector<8x256xf32>
    %4 = arith.mulf %1, %3 : vector<8x256xf32>
    %c0_4 = arith.constant 0 : index
    %c0_5 = arith.constant 0 : index
    %5 = vector.load %arg9[%c0_4, %c0_5] : memref<72x256xf32, #tpu.memory_space<vmem>>, vector<8x256xf32>
    tpu.vector_store %arg9[%c0_4, %c0_5], %4 {strides = array<i32>} : memref<72x256xf32, #tpu.memory_space<vmem>>, vector<8x256xf32>,
    %c0_6 = arith.constant 0 : index
    %c0_7 = arith.constant 0 : index
    %c1 = arith.constant 1 : index
    %6 = vector.load %arg3[%c0_6, %c0_7, %c1] : memref<1x8x384xf32, #tpu.memory_space<vmem>>, vector<1x8x256xf32>
    %7 = vector.shape_cast %6 : vector<1x8x256xf32> to vector<8x256xf32>
    %c8 = arith.constant 8 : index
    %c0_8 = arith.constant 0 : index
    %8 = vector.load %arg9[%c8, %c0_8] : memref<72x256xf32, #tpu.memory_space<vmem>>, vector<8x256xf32>
    tpu.vector_store %arg9[%c8, %c0_8], %7 {strides = array<i32>} : memref<72x256xf32, #tpu.memory_space<vmem>>, vector<8x256xf32>,
    %c0_9 = arith.constant 0 : index
    %c0_10 = arith.constant 0 : index
    %c2 = arith.constant 2 : index
    %9 = vector.load %arg3[%c0_9, %c0_10, %c2] : memref<1x8x384xf32, #tpu.memory_space<vmem>>, vector<1x8x256xf32>
    %10 = vector.shape_cast %9 : vector<1x8x256xf32> to vector<8x256xf32>
    %c1_11 = arith.constant 1 : index
    %c0_12 = arith.constant 0 : index
    %11 = vector.load %arg2[%c1_11, %c0_12] : memref<2x256xf32, #tpu.memory_space<vmem>>, vector<1x256xf32>
    %12 = vector.broadcast %11 : vector<1x256xf32> to vector<8x256xf32>
    %13 = arith.mulf %10, %12 : vector<8x256xf32>
    %c16 = arith.constant 16 : index
    %c0_13 = arith.constant 0 : index
    %14 = vector.load %arg9[%c16, %c0_13] : memref<72x256xf32, #tpu.memory_space<vmem>>, vector<8x256xf32>
    tpu.vector_store %arg9[%c16, %c0_13], %13 {strides = array<i32>} : memref<72x256xf32, #tpu.memory_space<vmem>>, vector<8x256xf32>,
    %c0_14 = arith.constant 0 : index
    %c0_15 = arith.constant 0 : index
    %c16_16 = arith.constant 16 : index
    %15 = vector.load %arg3[%c0_14, %c0_15, %c16_16] : memref<1x8x384xf32, #tpu.memory_space<vmem>>, vector<1x8x256xf32>
    %16 = vector.shape_cast %15 : vector<1x8x256xf32> to vector<8x256xf32>
    %c0_17 = arith.constant 0 : index
    %c0_18 = arith.constant 0 : index
    %17 = vector.load %arg2[%c0_17, %c0_18] : memref<2x256xf32, #tpu.memory_space<vmem>>, vector<1x256xf32>
    %18 = vector.broadcast %17 : vector<1x256xf32> to vector<8x256xf32>
    %19 = arith.mulf %16, %18 : vector<8x256xf32>
    %c24 = arith.constant 24 : index
    %c0_19 = arith.constant 0 : index
    %20 = vector.load %arg9[%c24, %c0_19] : memref<72x256xf32, #tpu.memory_space<vmem>>, vector<8x256xf32>
    tpu.vector_store %arg9[%c24, %c0_19], %19 {strides = array<i32>} : memref<72x256xf32, #tpu.memory_space<vmem>>, vector<8x256xf32>,
    %c0_20 = arith.constant 0 : index
    %c0_21 = arith.constant 0 : index
    %c17 = arith.constant 17 : index
    %21 = vector.load %arg3[%c0_20, %c0_21, %c17] : memref<1x8x384xf32, #tpu.memory_space<vmem>>, vector<1x8x256xf32>
    %22 = vector.shape_cast %21 : vector<1x8x256xf32> to vector<8x256xf32>
    %c32 = arith.constant 32 : index
    %c0_22 = arith.constant 0 : index
    %23 = vector.load %arg9[%c32, %c0_22] : memref<72x256xf32, #tpu.memory_space<vmem>>, vector<8x256xf32>
    tpu.vector_store %arg9[%c32, %c0_22], %22 {strides = array<i32>} : memref<72x256xf32, #tpu.memory_space<vmem>>, vector<8x256xf32>,
    %c0_23 = arith.constant 0 : index
    %c0_24 = arith.constant 0 : index
    %c18 = arith.constant 18 : index
    %24 = vector.load %arg3[%c0_23, %c0_24, %c18] : memref<1x8x384xf32, #tpu.memory_space<vmem>>, vector<1x8x256xf32>
    %25 = vector.shape_cast %24 : vector<1x8x256xf32> to vector<8x256xf32>
    %c1_25 = arith.constant 1 : index
    %c0_26 = arith.constant 0 : index
    %26 = vector.load %arg2[%c1_25, %c0_26] : memref<2x256xf32, #tpu.memory_space<vmem>>, vector<1x256xf32>
    %27 = vector.broadcast %26 : vector<1x256xf32> to vector<8x256xf32>
    %28 = arith.mulf %25, %27 : vector<8x256xf32>
    %c40 = arith.constant 40 : index
    %c0_27 = arith.constant 0 : index
    %29 = vector.load %arg9[%c40, %c0_27] : memref<72x256xf32, #tpu.memory_space<vmem>>, vector<8x256xf32>
    tpu.vector_store %arg9[%c40, %c0_27], %28 {strides = array<i32>} : memref<72x256xf32, #tpu.memory_space<vmem>>, vector<8x256xf32>,
    %c0_28 = arith.constant 0 : index
    %c0_29 = arith.constant 0 : index
    %c32_30 = arith.constant 32 : index
    %30 = vector.load %arg3[%c0_28, %c0_29, %c32_30] : memref<1x8x384xf32, #tpu.memory_space<vmem>>, vector<1x8x256xf32>
    %31 = vector.shape_cast %30 : vector<1x8x256xf32> to vector<8x256xf32>
    %c0_31 = arith.constant 0 : index
    %c0_32 = arith.constant 0 : index
    %32 = vector.load %arg2[%c0_31, %c0_32] : memref<2x256xf32, #tpu.memory_space<vmem>>, vector<1x256xf32>
    %33 = vector.broadcast %32 : vector<1x256xf32> to vector<8x256xf32>
    %34 = arith.mulf %31, %33 : vector<8x256xf32>
    %c48 = arith.constant 48 : index
    %c0_33 = arith.constant 0 : index
    %35 = vector.load %arg9[%c48, %c0_33] : memref<72x256xf32, #tpu.memory_space<vmem>>, vector<8x256xf32>
    tpu.vector_store %arg9[%c48, %c0_33], %34 {strides = array<i32>} : memref<72x256xf32, #tpu.memory_space<vmem>>, vector<8x256xf32>,
    %c0_34 = arith.constant 0 : index
    %c0_35 = arith.constant 0 : index
    %c33 = arith.constant 33 : index
    %36 = vector.load %arg3[%c0_34, %c0_35, %c33] : memref<1x8x384xf32, #tpu.memory_space<vmem>>, vector<1x8x256xf32>
    %37 = vector.shape_cast %36 : vector<1x8x256xf32> to vector<8x256xf32>
    %c56 = arith.constant 56 : index
    %c0_36 = arith.constant 0 : index
    %38 = vector.load %arg9[%c56, %c0_36] : memref<72x256xf32, #tpu.memory_space<vmem>>, vector<8x256xf32>
    tpu.vector_store %arg9[%c56, %c0_36], %37 {strides = array<i32>} : memref<72x256xf32, #tpu.memory_space<vmem>>, vector<8x256xf32>,
    %c0_37 = arith.constant 0 : index
    %c0_38 = arith.constant 0 : index
    %c34 = arith.constant 34 : index
    %39 = vector.load %arg3[%c0_37, %c0_38, %c34] : memref<1x8x384xf32, #tpu.memory_space<vmem>>, vector<1x8x256xf32>
    %40 = vector.shape_cast %39 : vector<1x8x256xf32> to vector<8x256xf32>
    %c1_39 = arith.constant 1 : index
    %c0_40 = arith.constant 0 : index
    %41 = vector.load %arg2[%c1_39, %c0_40] : memref<2x256xf32, #tpu.memory_space<vmem>>, vector<1x256xf32>
    %42 = vector.broadcast %41 : vector<1x256xf32> to vector<8x256xf32>
    %43 = arith.mulf %40, %42 : vector<8x256xf32>
    %c64 = arith.constant 64 : index
    %c0_41 = arith.constant 0 : index
    %44 = vector.load %arg9[%c64, %c0_41] : memref<72x256xf32, #tpu.memory_space<vmem>>, vector<8x256xf32>
    tpu.vector_store %arg9[%c64, %c0_41], %43 {strides = array<i32>} : memref<72x256xf32, #tpu.memory_space<vmem>>, vector<8x256xf32>,
    %c0_42 = arith.constant 0 : index
    %c0_43 = arith.constant 0 : index
    %45 = vector.load %arg4[%c0_42, %c0_43] : memref<8x72xf32, #tpu.memory_space<vmem>>, vector<8x72xf32>
    %c0_44 = arith.constant 0 : index
    %c0_45 = arith.constant 0 : index
    %46 = vector.load %arg9[%c0_44, %c0_45] : memref<72x256xf32, #tpu.memory_space<vmem>>, vector<72x256xf32>
    %cst = arith.constant dense<0.000000e+00> : vector<8x256xf32>
    %47 = tpu.matmul %45, %46, %cst {dimension_numbers = #tpu.dot_dimension_numbers<[1], [0], [0], [1], [0, 0, 1, 1], [], []>} : vector<8x72xf32>, vector<72x256xf32>, vector<8x256xf32> -> vector<8x256xf32>
    %c0_46 = arith.constant 0 : index
    %c0_47 = arith.constant 0 : index
    %48 = vector.load %arg5[%c0_46, %c0_47] : memref<8x1xf32, #tpu.memory_space<vmem>>, vector<8x1xf32>
    %49 = vector.broadcast %48 : vector<8x1xf32> to vector<8x256xf32>
    %50 = arith.addf %47, %49 : vector<8x256xf32>
    %cst_48 = arith.constant 0.000000e+00 : f32
    %51 = vector.broadcast %cst_48 : f32 to vector<8x256xf32>
    %52 = arith.cmpf ogt, %50, %51 : vector<8x256xf32>
    %cst_49 = arith.constant 1.000000e-01 : f32
    %53 = vector.broadcast %cst_49 : f32 to vector<8x256xf32>
    %54 = arith.mulf %53, %50 : vector<8x256xf32>
    %55 = arith.select %52, %50, %54 : vector<8x256xi1>, vector<8x256xf32>
    %c0_50 = arith.constant 0 : index
    %c0_51 = arith.constant 0 : index
    %56 = vector.load %arg6[%c0_50, %c0_51] : memref<24x8xf32, #tpu.memory_space<vmem>>, vector<24x8xf32>
    %cst_52 = arith.constant dense<0.000000e+00> : vector<24x256xf32>
    %57 = tpu.matmul %56, %55, %cst_52 {dimension_numbers = #tpu.dot_dimension_numbers<[1], [0], [0], [1], [0, 0, 1, 1], [], []>} : vector<24x8xf32>, vector<8x256xf32>, vector<24x256xf32> -> vector<24x256xf32>
    %c0_53 = arith.constant 0 : index
    %c0_54 = arith.constant 0 : index
    %58 = vector.load %arg7[%c0_53, %c0_54] : memref<24x1xf32, #tpu.memory_space<vmem>>, vector<24x1xf32>
    %59 = vector.broadcast %58 : vector<24x1xf32> to vector<24x256xf32>
    %60 = arith.addf %57, %59 : vector<24x256xf32>
    %c0_55 = arith.constant 0 : index
    %c0_56 = arith.constant 0 : index
    %c0_57 = arith.constant 0 : index
    %61 = vector.load %arg8[%c0_55, %c0_56, %c0_57] : memref<1x24x256xf32, #tpu.memory_space<vmem>>, vector<1x24x256xf32>
    %62 = vector.shape_cast %61 : vector<1x24x256xf32> to vector<24x256xf32>
    %63 = vector.shape_cast %60 : vector<24x256xf32> to vector<1x24x256xf32>
    tpu.vector_store %arg8[%c0_55, %c0_56, %c0_57], %63 {strides = array<i32>} : memref<1x24x256xf32, #tpu.memory_space<vmem>>, vector<1x24x256xf32>,
    return
  }
  func.func @transform_0(%arg0: i32, %arg1: i32) -> (i32, i32) {
    %c0_i32 = arith.constant 0 : i32
    %c0_i32_0 = arith.constant 0 : i32
    return %c0_i32, %arg1 : i32, i32
  }
  func.func @transform_1(%arg0: i32, %arg1: i32) -> (i32, i32, i32) {
    %c0_i32 = arith.constant 0 : i32
    %c0_i32_0 = arith.constant 0 : i32
    %c0_i32_1 = arith.constant 0 : i32
    return %arg0, %c0_i32, %c0_i32_0 : i32, i32, i32
  }
  func.func @transform_2(%arg0: i32, %arg1: i32) -> (i32, i32) {
    %c0_i32 = arith.constant 0 : i32
    %c0_i32_0 = arith.constant 0 : i32
    %c0_i32_1 = arith.constant 0 : i32
    return %c0_i32, %c0_i32_0 : i32, i32
  }
  func.func @transform_3(%arg0: i32, %arg1: i32) -> (i32, i32) {
    %c0_i32 = arith.constant 0 : i32
    %c0_i32_0 = arith.constant 0 : i32
    %c0_i32_1 = arith.constant 0 : i32
    return %c0_i32, %c0_i32_0 : i32, i32
  }
  func.func @transform_4(%arg0: i32, %arg1: i32) -> (i32, i32) {
    %c0_i32 = arith.constant 0 : i32
    %c0_i32_0 = arith.constant 0 : i32
    %c0_i32_1 = arith.constant 0 : i32
    return %c0_i32, %c0_i32_0 : i32, i32
  }
  func.func @transform_5(%arg0: i32, %arg1: i32) -> (i32, i32) {
    %c0_i32 = arith.constant 0 : i32
    %c0_i32_0 = arith.constant 0 : i32
    %c0_i32_1 = arith.constant 0 : i32
    return %c0_i32, %c0_i32_0 : i32, i32
  }
  func.func @transform_6(%arg0: i32, %arg1: i32) -> (i32, i32, i32) {
    %c0_i32 = arith.constant 0 : i32
    %c0_i32_0 = arith.constant 0 : i32
    return %arg0, %c0_i32, %arg1 : i32, i32, i32
  }
}

</mosaic_0001>

<llo_original>
// kernel: tpu_custom_call.1
$region0: #{tpu_custom_call.1}
  #allocation0 [shape = 'u32[]', space=smem, size = 0x4, offset = 0x4, fixed_abs, tag = 'smem constant byte address 0x4 - core index']
  #allocation1 [shape = 'u32[144,128]{1,0:T(1,128)}', space=vmem, size = 0x12000, scoped, tag = 'internal scratch']
  #allocation2 [shape = 'f32[72,256]{1,0:T(8,128)}', space=vmem, size = 0x12000, scoped, tag = 'scratch operand']
  %s0 = inlined_call_operand.vmem [shape: f32[2,256], index: 0, kind: input, shape index: {}]
  %s1 = inlined_call_operand.vmem [shape: f32[2,8,384], index: 1, kind: input, shape index: {}]
  %s2 = inlined_call_operand.vmem [shape: f32[8,72], index: 2, kind: input, shape index: {}]
  %s3 = inlined_call_operand.vmem [shape: f32[8,1], index: 3, kind: input, shape index: {}]
  %s4 = inlined_call_operand.vmem [shape: f32[24,8], index: 4, kind: input, shape index: {}]
  %s5 = inlined_call_operand.vmem [shape: f32[24,1], index: 5, kind: input, shape index: {}]
  %s6 = inlined_call_operand.hbm [shape: f32[2,24,256], index: 6, kind: output, shape index: {}]
  %s7 = sld [smem:[#allocation0]]
  $region57: #{tpu_custom_call.1} parent=0
    _
  %s9 = ssub.s32 1, %s7
  %s10 = scalar_select 0, %s9, %s7
  $region1: #{tpu_custom_call.1} parent=0
    #allocation3 [shape = 'u8[49152]{0}', space=vmem, size = 0xc000, scoped, tag = 'output window, operand 0']
    #allocation4 [shape = 's32[2]{0}', space=sflag, size = 0x8, scoped, tag = 'scoped memory for tpu_custom_call.1']
    %11 = vsyncpa [#allocation4], 0
    %s12 = scalar_lea.sflag [#allocation4], 1
    %13 = vsyncpa %s12, 0
    loop: start=0, step=1, limit=4
    $region2: #{tpu_custom_call.1} parent=1 // loop_pre_header
      _
    $region3: #{tpu_custom_call.1} parent=1 // loop_header
      %s15 = sphi 0, %s19
      %p16 = scmp.ge.s32.totalorder %s15, 4
      %s22 = sphi 0, %s34
      %s23 = sphi 0, %s30
      %s24 = sphi 0, %s22
      %s25 = sphi 0, %s23
      %s26 = sphi 0, %s24
      %s27 = sphi 0, %s25
      %s37 = sphi 0, %s39
      %s40 = sphi 0, %s37
      %s41 = sphi 0, %s40
      %s57 = sphi 0, %s41
      %s63 = sphi 0, %s65
      %s66 = sphi 0, %s63
      %s67 = sphi 0, %s66
      %s83 = sphi 0, %s67
      %s87 = sphi 0, %s87
      %s89 = sphi 0, %s87
      %s90 = sphi 0, %s89
      %s104 = sphi 0, %s90
      %s108 = sphi 0, %s108
      %s110 = sphi 0, %s108
      %s111 = sphi 0, %s110
      %s125 = sphi 0, %s111
      %s129 = sphi 0, %s129
      %s131 = sphi 0, %s129
      %s132 = sphi 0, %s131
      %s146 = sphi 0, %s132
      %s150 = sphi 0, %s150
      %s152 = sphi 0, %s150
      %s153 = sphi 0, %s152
      %s167 = sphi 0, %s153
      %s175 = sphi 0, %s177
      %s178 = sphi 0, %s175
      %s179 = sphi 0, %s178
      %s195 = sphi 0, %s179
    $region4: #{tpu_custom_call.1} parent=1 // loop_header_branch
      %18 = sbr.rel (%p16) target = $region8
    $region5: #{tpu_custom_call.1} parent=1 // loop_body
      %s20 = ssub.s32 %s15, 1
      %s21 = ssub.s32 %s15, 2
      %s28 = sadd.s32 1, %s23
      %p29 = scmp.ge.s32.totalorder %s28, 1
      %s30 = scalar_select %p29, 0, %s28
      %s31 = sadd.s32 1, %s22
      %s32 = scalar_select %p29, %s31, %s22
      %p33 = scmp.ge.s32.totalorder %s32, 2
      %s34 = scalar_select %p33, 0, %s32
      %s35 = ssub.s32 %s23, %s30
      %p36 = scmp.eq.s32.totalorder %s35, 0
      %s38 = sadd.s32 %s37, 1
      %s39 = scalar_select %p36, %s37, %s38
      %p42 = pneg %p36
      %p43 = scmp.eq.s32.totalorder %s15, 1
      %p44 = por %p42, %p43
      %p45 = scmp.ne.s32.totalorder %s37, %s40
      %p46 = scmp.eq.s32.totalorder %s15, 0
      %p47 = por %p45, %p46
      %p48 = scmp.ne.s32.totalorder %s37, %s40
      %p49 = scmp.eq.s32.totalorder %s20, 1
      %p50 = por %p48, %p49
      %p51 = scmp.ne.s32.totalorder %s40, %s41
      %p52 = scmp.eq.s32.totalorder %s20, 0
      %p53 = por %p51, %p52
      %p54 = scmp.ne.s32.totalorder %s40, %s41
      %p55 = scmp.eq.s32.totalorder %s21, 1
      %p56 = por %p54, %p55
      %p58 = scmp.ne.s32.totalorder %s41, %s57
      %p59 = scmp.eq.s32.totalorder %s21, 0
      %p60 = por %p58, %p59
      %s61 = ssub.s32 %s22, %s34
      %p62 = scmp.eq.s32.totalorder %s61, 0
      %s64 = sadd.s32 %s63, 1
      %s65 = scalar_select %p62, %s63, %s64
      %p68 = pneg %p62
      %p69 = scmp.eq.s32.totalorder %s15, 1
      %p70 = por %p68, %p69
      %p71 = scmp.ne.s32.totalorder %s63, %s66
      %p72 = scmp.eq.s32.totalorder %s15, 0
      %p73 = por %p71, %p72
      %p74 = scmp.ne.s32.totalorder %s63, %s66
      %p75 = scmp.eq.s32.totalorder %s20, 1
      %p76 = por %p74, %p75
      %p77 = scmp.ne.s32.totalorder %s66, %s67
      %p78 = scmp.eq.s32.totalorder %s20, 0
      %p79 = por %p77, %p78
      %p80 = scmp.ne.s32.totalorder %s66, %s67
      %p81 = scmp.eq.s32.totalorder %s21, 1
      %p82 = por %p80, %p81
      %p84 = scmp.ne.s32.totalorder %s67, %s83
      %p85 = scmp.eq.s32.totalorder %s21, 0
      %p86 = por %p84, %p85
      %s88 = sadd.s32 %s87, 1
      %p91 = scmp.eq.s32.totalorder %s15, 1
      %p92 = scmp.ne.s32.totalorder %s87, %s89
      %p93 = scmp.eq.s32.totalorder %s15, 0
      %p94 = por %p92, %p93
      %p95 = scmp.ne.s32.totalorder %s87, %s89
      %p96 = scmp.eq.s32.totalorder %s20, 1
      %p97 = por %p95, %p96
      %p98 = scmp.ne.s32.totalorder %s89, %s90
      %p99 = scmp.eq.s32.totalorder %s20, 0
      %p100 = por %p98, %p99
      %p101 = scmp.ne.s32.totalorder %s89, %s90
      %p102 = scmp.eq.s32.totalorder %s21, 1
      %p103 = por %p101, %p102
      %p105 = scmp.ne.s32.totalorder %s90, %s104
      %p106 = scmp.eq.s32.totalorder %s21, 0
      %p107 = por %p105, %p106
      %s109 = sadd.s32 %s108, 1
      %p112 = scmp.eq.s32.totalorder %s15, 1
      %p113 = scmp.ne.s32.totalorder %s108, %s110
      %p114 = scmp.eq.s32.totalorder %s15, 0
      %p115 = por %p113, %p114
      %p116 = scmp.ne.s32.totalorder %s108, %s110
      %p117 = scmp.eq.s32.totalorder %s20, 1
      %p118 = por %p116, %p117
      %p119 = scmp.ne.s32.totalorder %s110, %s111
      %p120 = scmp.eq.s32.totalorder %s20, 0
      %p121 = por %p119, %p120
      %p122 = scmp.ne.s32.totalorder %s110, %s111
      %p123 = scmp.eq.s32.totalorder %s21, 1
      %p124 = por %p122, %p123
      %p126 = scmp.ne.s32.totalorder %s111, %s125
      %p127 = scmp.eq.s32.totalorder %s21, 0
      %p128 = por %p126, %p127
      %s130 = sadd.s32 %s129, 1
      %p133 = scmp.eq.s32.totalorder %s15, 1
      %p134 = scmp.ne.s32.totalorder %s129, %s131
      %p135 = scmp.eq.s32.totalorder %s15, 0
      %p136 = por %p134, %p135
      %p137 = scmp.ne.s32.totalorder %s129, %s131
      %p138 = scmp.eq.s32.totalorder %s20, 1
      %p139 = por %p137, %p138
      %p140 = scmp.ne.s32.totalorder %s131, %s132
      %p141 = scmp.eq.s32.totalorder %s20, 0
      %p142 = por %p140, %p141
      %p143 = scmp.ne.s32.totalorder %s131, %s132
      %p144 = scmp.eq.s32.totalorder %s21, 1
      %p145 = por %p143, %p144
      %p147 = scmp.ne.s32.totalorder %s132, %s146
      %p148 = scmp.eq.s32.totalorder %s21, 0
      %p149 = por %p147, %p148
      %s151 = sadd.s32 %s150, 1
      %p154 = scmp.eq.s32.totalorder %s15, 1
      %p155 = scmp.ne.s32.totalorder %s150, %s152
      %p156 = scmp.eq.s32.totalorder %s15, 0
      %p157 = por %p155, %p156
      %p158 = scmp.ne.s32.totalorder %s150, %s152
      %p159 = scmp.eq.s32.totalorder %s20, 1
      %p160 = por %p158, %p159
      %p161 = scmp.ne.s32.totalorder %s152, %s153
      %p162 = scmp.eq.s32.totalorder %s20, 0
      %p163 = por %p161, %p162
      %p164 = scmp.ne.s32.totalorder %s152, %s153
      %p165 = scmp.eq.s32.totalorder %s21, 1
      %p166 = por %p164, %p165
      %p168 = scmp.ne.s32.totalorder %s153, %s167
      %p169 = scmp.eq.s32.totalorder %s21, 0
      %p170 = por %p168, %p169
      %s171 = ssub.s32 %s22, %s34
      %s172 = ssub.s32 %s23, %s30
      %s173 = sor.u32 %s171, %s172
      %p174 = scmp.eq.s32.totalorder %s173, 0
      %s176 = sadd.s32 %s175, 1
      %s177 = scalar_select %p174, %s175, %s176
      %p180 = pneg %p174
      %p181 = scmp.eq.s32.totalorder %s15, 1
      %p182 = por %p180, %p181
      %p183 = scmp.ne.s32.totalorder %s175, %s178
      %p184 = scmp.eq.s32.totalorder %s15, 0
      %p185 = por %p183, %p184
      %p186 = scmp.ne.s32.totalorder %s175, %s178
      %p187 = scmp.eq.s32.totalorder %s20, 1
      %p188 = por %p186, %p187
      %p189 = scmp.ne.s32.totalorder %s178, %s179
      %p190 = scmp.eq.s32.totalorder %s20, 0
      %p191 = por %p189, %p190
      %p192 = scmp.ne.s32.totalorder %s178, %s179
      %p193 = scmp.eq.s32.totalorder %s21, 1
      %p194 = por %p192, %p193
      %p196 = scmp.ne.s32.totalorder %s179, %s195
      %p197 = scmp.eq.s32.totalorder %s21, 0
      %p198 = por %p196, %p197
      %p199 = scmp.le.s32.totalorder 1, %s15
      %p200 = scmp.lt.s32.totalorder %s15, 3
      %p201 = pnand %p199, %p200
      %p202 = pneg %p201
      // Predicated region
      $region9: #{tpu_custom_call.1} parent=5 // pred_check
        _
      $region10: #{tpu_custom_call.1} parent=5 // pred_check_branch
        %204 = sbr.rel (%p201) target = $region12
      $region11: #{tpu_custom_call.1} parent=5 // pred_region
        %s205 = ssub.s32 %s15, 1
        // Predicated region
        $region13: #{tpu_custom_call.1} parent=11 // pred_check
          %p206 = pneg %p53
        $region14: #{tpu_custom_call.1} parent=11 // pred_check_branch
          %208 = sbr.rel (%p206) target = $region16
        $region15: #{tpu_custom_call.1} parent=11 // pred_region
          %s209 = smul.u32 2, %s25
          %p210 = scmp.lt.s32.totalorder %s209, 1
          %s211 = scalar_select %p210, %s209, 1
          %s212 = smul.addr %s211, 2
          %s213 = scalar_lea.vmem %s0, %s212
          %s214 = smul.u32 2, %s25
        $region16: #{tpu_custom_call.1} parent=11 // pred_fallthru
          _
        // Predicated region
        $region17: #{tpu_custom_call.1} parent=11 // pred_check
          %p215 = pneg %p100
        $region18: #{tpu_custom_call.1} parent=11 // pred_check_branch
          %217 = sbr.rel (%p215) target = $region20
        $region19: #{tpu_custom_call.1} parent=11 // pred_region
          _
        $region20: #{tpu_custom_call.1} parent=11 // pred_fallthru
          _
        // Predicated region
        $region21: #{tpu_custom_call.1} parent=11 // pred_check
          %p218 = pneg %p121
        $region22: #{tpu_custom_call.1} parent=11 // pred_check_branch
          %220 = sbr.rel (%p218) target = $region24
        $region23: #{tpu_custom_call.1} parent=11 // pred_region
          _
        $region24: #{tpu_custom_call.1} parent=11 // pred_fallthru
          _
        // Predicated region
        $region25: #{tpu_custom_call.1} parent=11 // pred_check
          %p221 = pneg %p142
        $region26: #{tpu_custom_call.1} parent=11 // pred_check_branch
          %223 = sbr.rel (%p221) target = $region28
        $region27: #{tpu_custom_call.1} parent=11 // pred_region
          _
        $region28: #{tpu_custom_call.1} parent=11 // pred_fallthru
          _
        // Predicated region
        $region29: #{tpu_custom_call.1} parent=11 // pred_check
          %p224 = pneg %p163
        $region30: #{tpu_custom_call.1} parent=11 // pred_check_branch
          %226 = sbr.rel (%p224) target = $region32
        $region31: #{tpu_custom_call.1} parent=11 // pred_region
          _
        $region32: #{tpu_custom_call.1} parent=11 // pred_fallthru
          _
      $region12: #{tpu_custom_call.1} parent=5 // pred_fallthru
        _
      %p227 = scmp.lt.s32.totalorder %s15, 2
      // Predicated region
      $region33: #{tpu_custom_call.1} parent=5 // pred_check
        %p228 = pneg %p227
      $region34: #{tpu_custom_call.1} parent=5 // pred_check_branch
        %230 = sbr.rel (%p228) target = $region36
      $region35: #{tpu_custom_call.1} parent=5 // pred_region
        // Predicated region
        $region37: #{tpu_custom_call.1} parent=35 // pred_check
          %p231 = pneg %p73
        $region38: #{tpu_custom_call.1} parent=35 // pred_check_branch
          %233 = sbr.rel (%p231) target = $region40
        $region39: #{tpu_custom_call.1} parent=35 // pred_region
          %p234 = scmp.lt.s32.totalorder %s22, 1
          %s235 = scalar_select %p234, %s22, 1
          %s236 = smul.addr %s235, 3
          %s237 = smul.addr %s236, 8
          %s238 = scalar_lea.vmem %s1, %s237
        $region40: #{tpu_custom_call.1} parent=35 // pred_fallthru
          _
      $region36: #{tpu_custom_call.1} parent=5 // pred_fallthru
        _
      %p239 = scmp.le.s32.totalorder 1, %s15
      %p240 = scmp.lt.s32.totalorder %s15, 3
      %p241 = pnand %p239, %p240
      %p242 = pneg %p241
      // Predicated region
      $region41: #{tpu_custom_call.1} parent=5 // pred_check
        _
      $region42: #{tpu_custom_call.1} parent=5 // pred_check_branch
        %244 = sbr.rel (%p241) target = $region44
      $region43: #{tpu_custom_call.1} parent=5 // pred_region
        %s245 = ssub.s32 %s15, 1
        %s246 = smul.u32 2, %s25
        %p247 = scmp.lt.s32.totalorder %s246, 1
        %s248 = scalar_select %p247, %s246, 1
        %s249 = smul.addr %s248, 2
        %s250 = scalar_lea.vmem %s0, %s249
        %p251 = pneg %p53
        %p252 = pneg %p50
        %p253 = scmp.lt.s32.totalorder %s24, 1
        %s254 = scalar_select %p253, %s24, 1
        %s255 = smul.addr %s254, 3
        %s256 = smul.addr %s255, 8
        %s257 = scalar_lea.vmem %s1, %s256
        %p258 = pneg %p79
        %p259 = pneg %p76
        %p260 = pneg %p100
        %p261 = pneg %p97
        %p262 = pneg %p121
        %p263 = pneg %p118
        %p264 = pneg %p142
        %p265 = pneg %p139
        %p266 = pneg %p163
        %p267 = pneg %p160
        %p268 = pneg %p191
        %p269 = pneg %p188
        %s270 = sand.u32 %s178, 1
        %s271 = scalar_lea.sflag [#allocation4], %s270
        %s272 = sand.u32 %s178, 1
        %s273 = smul.addr %s272, 48
        %s274 = scalar_lea.vmem [#allocation3], %s273
        %s275 = smul.u32 2, %s25
        %p276 = scmp.lt.s32.totalorder %s275, 1
        %s277 = scalar_select %p276, %s275, 1
        %s278 = smul.addr %s277, 2
        %s279 = scalar_lea.vmem %s0, %s278
        %s280 = smul.u32 2, %s25
        %p281 = scmp.lt.s32.totalorder %s24, 1
        %s282 = scalar_select %p281, %s24, 1
        %s283 = smul.addr %s282, 3
        %s284 = smul.addr %s283, 8
        %s285 = scalar_lea.vmem %s1, %s284
        %s286 = smul.u32 2, %s25
        %v287 = vld [vmem:[%s285] sm:$0xff]
        %v288 = vld [vmem:[%s285 + $0x8] sm:$0xff]
        %v289 = vld [vmem:[%s279] ss:$2 sm:$0x3]
        %v291 = vlaneseq
        %v292 = vshrl.u32 %v291, 7
        %v293 = vsub.s32 0, %v292
        %v294 = vrot.slane %v289, %v293
        %v295 = vlaneseq
        %v296 = vshrl.u32 %v295, 7
        %v297 = vsub.s32 1, %v296
        %v298 = vrot.slane %v289, %v297
        %v301 = vmul.f32 %v287, %v294
        %v302 = vmul.f32 %v288, %v298
        %303 = vst [vmem:[#allocation2] sm:$0xff] %v301
        %304 = vst [vmem:[#allocation2 + $0x8] sm:$0xff] %v302
        %v305 = vld [vmem:[%s285] sm:$0xff]
        %v306 = vld [vmem:[%s285 + $0x8] sm:$0xff]
        %v307 = vld [vmem:[%s285 + $0x10] sm:$0xff]
        %311 = vrot.lane.b32.xlu0 %v305, 127
        %v312 = vpop.permute.xlu0 %311
        %313 = vrot.lane.b32.xlu0 %v306, 127
        %v314 = vpop.permute.xlu0 %313
        %315 = vrot.lane.b32.xlu0 %v307, 127
        %v316 = vpop.permute.xlu0 %315
        %vm317 = vcmask 1039360
        %v318 = vsel %vm317, %v312, %v314
        %v319 = vsel %vm317, %v314, %v316
        %322 = vst [vmem:[#allocation2 + $0x10] sm:$0xff] %v318
        %323 = vst [vmem:[#allocation2 + $0x18] sm:$0xff] %v319
        %v324 = vld [vmem:[%s285] sm:$0xff]
        %v325 = vld [vmem:[%s285 + $0x8] sm:$0xff]
        %v326 = vld [vmem:[%s285 + $0x10] sm:$0xff]
        %s327 = scalar_lea.vmem %s279, 1
        %v328 = vld [vmem:[%s327] ss:$2 sm:$0x3]
        %v330 = vlaneseq
        %v331 = vshrl.u32 %v330, 7
        %v332 = vsub.s32 0, %v331
        %v333 = vrot.slane %v328, %v332
        %v334 = vlaneseq
        %v335 = vshrl.u32 %v334, 7
        %v336 = vsub.s32 1, %v335
        %v337 = vrot.slane %v328, %v336
        %338 = vrot.lane.b32.xlu0 %v333, 2
        %v339 = vpop.permute.xlu0 %338
        %340 = vrot.lane.b32.xlu0 %v337, 2
        %v341 = vpop.permute.xlu0 %340
        %vm342 = vcmask 15360
        %v343 = vsel %vm342, %v339, %v341
        %v347 = vmul.f32 %v324, %v339
        %v348 = vmul.f32 %v325, %v343
        %v349 = vmul.f32 %v326, %v341
        %353 = vrot.lane.b32.xlu0 %v347, 126
        %v354 = vpop.permute.xlu0 %353
        %355 = vrot.lane.b32.xlu0 %v348, 126
        %v356 = vpop.permute.xlu0 %355
        %357 = vrot.lane.b32.xlu0 %v349, 126
        %v358 = vpop.permute.xlu0 %357
        %vm359 = vcmask 1031168
        %v360 = vsel %vm359, %v354, %v356
        %v361 = vsel %vm359, %v356, %v358
        %364 = vst [vmem:[#allocation2 + $0x20] sm:$0xff] %v360
        %365 = vst [vmem:[#allocation2 + $0x28] sm:$0xff] %v361
        %v366 = vld [vmem:[%s285] sm:$0xff]
        %v367 = vld [vmem:[%s285 + $0x8] sm:$0xff]
        %v368 = vld [vmem:[%s285 + $0x10] sm:$0xff]
        %v369 = vld [vmem:[%s279] ss:$2 sm:$0x3]
        %v371 = vlaneseq
        %v372 = vshrl.u32 %v371, 7
        %v373 = vsub.s32 0, %v372
        %v374 = vrot.slane %v369, %v373
        %v375 = vlaneseq
        %v376 = vshrl.u32 %v375, 7
        %v377 = vsub.s32 1, %v376
        %v378 = vrot.slane %v369, %v377
        %379 = vrot.lane.b32.xlu0 %v374, 16
        %v380 = vpop.permute.xlu0 %379
        %381 = vrot.lane.b32.xlu0 %v378, 16
        %v382 = vpop.permute.xlu0 %381
        %vm383 = vcmask 130048
        %v384 = vsel %vm383, %v380, %v382
        %v388 = vmul.f32 %v366, %v380
        %v389 = vmul.f32 %v367, %v384
        %v390 = vmul.f32 %v368, %v382
        %394 = vrot.lane.b32.xlu0 %v388, 112
        %v395 = vpop.permute.xlu0 %394
        %396 = vrot.lane.b32.xlu0 %v389, 112
        %v397 = vpop.permute.xlu0 %396
        %398 = vrot.lane.b32.xlu0 %v390, 112
        %v399 = vpop.permute.xlu0 %398
        %vm400 = vcmask 916480
        %v401 = vsel %vm400, %v395, %v397
        %v402 = vsel %vm400, %v397, %v399
        %405 = vst [vmem:[#allocation2 + $0x30] sm:$0xff] %v401
        %406 = vst [vmem:[#allocation2 + $0x38] sm:$0xff] %v402
        %v407 = vld [vmem:[%s285] sm:$0xff]
        %v408 = vld [vmem:[%s285 + $0x8] sm:$0xff]
        %v409 = vld [vmem:[%s285 + $0x10] sm:$0xff]
        %413 = vrot.lane.b32.xlu0 %v407, 111
        %v414 = vpop.permute.xlu0 %413
        %415 = vrot.lane.b32.xlu0 %v408, 111
        %v416 = vpop.permute.xlu0 %415
        %417 = vrot.lane.b32.xlu0 %v409, 111
        %v418 = vpop.permute.xlu0 %417
        %vm419 = vcmask 908288
        %v420 = vsel %vm419, %v414, %v416
        %v421 = vsel %vm419, %v416, %v418
        %424 = vst [vmem:[#allocation2 + $0x40] sm:$0xff] %v420
        %425 = vst [vmem:[#allocation2 + $0x48] sm:$0xff] %v421
        %v426 = vld [vmem:[%s285] sm:$0xff]
        %v427 = vld [vmem:[%s285 + $0x8] sm:$0xff]
        %v428 = vld [vmem:[%s285 + $0x10] sm:$0xff]
        %v429 = vld [vmem:[%s327] ss:$2 sm:$0x3]
        %v431 = vlaneseq
        %v432 = vshrl.u32 %v431, 7
        %v433 = vsub.s32 0, %v432
        %v434 = vrot.slane %v429, %v433
        %v435 = vlaneseq
        %v436 = vshrl.u32 %v435, 7
        %v437 = vsub.s32 1, %v436
        %v438 = vrot.slane %v429, %v437
        %439 = vrot.lane.b32.xlu0 %v434, 18
        %v440 = vpop.permute.xlu0 %439
        %441 = vrot.lane.b32.xlu0 %v438, 18
        %v442 = vpop.permute.xlu0 %441
        %vm443 = vcmask 146432
        %v444 = vsel %vm443, %v440, %v442
        %v448 = vmul.f32 %v426, %v440
        %v449 = vmul.f32 %v427, %v444
        %v450 = vmul.f32 %v428, %v442
        %454 = vrot.lane.b32.xlu0 %v448, 110
        %v455 = vpop.permute.xlu0 %454
        %456 = vrot.lane.b32.xlu0 %v449, 110
        %v457 = vpop.permute.xlu0 %456
        %458 = vrot.lane.b32.xlu0 %v450, 110
        %v459 = vpop.permute.xlu0 %458
        %vm460 = vcmask 900096
        %v461 = vsel %vm460, %v455, %v457
        %v462 = vsel %vm460, %v457, %v459
        %465 = vst [vmem:[#allocation2 + $0x50] sm:$0xff] %v461
        %466 = vst [vmem:[#allocation2 + $0x58] sm:$0xff] %v462
        %v467 = vld [vmem:[%s285] sm:$0xff]
        %v468 = vld [vmem:[%s285 + $0x8] sm:$0xff]
        %v469 = vld [vmem:[%s285 + $0x10] sm:$0xff]
        %v470 = vld [vmem:[%s279] ss:$2 sm:$0x3]
        %v472 = vlaneseq
        %v473 = vshrl.u32 %v472, 7
        %v474 = vsub.s32 0, %v473
        %v475 = vrot.slane %v470, %v474
        %v476 = vlaneseq
        %v477 = vshrl.u32 %v476, 7
        %v478 = vsub.s32 1, %v477
        %v479 = vrot.slane %v470, %v478
        %480 = vrot.lane.b32.xlu0 %v475, 32
        %v481 = vpop.permute.xlu0 %480
        %482 = vrot.lane.b32.xlu0 %v479, 32
        %v483 = vpop.permute.xlu0 %482
        %vm484 = vcmask 261120
        %v485 = vsel %vm484, %v481, %v483
        %v489 = vmul.f32 %v467, %v481
        %v490 = vmul.f32 %v468, %v485
        %v491 = vmul.f32 %v469, %v483
        %495 = vrot.lane.b32.xlu0 %v489, 96
        %v496 = vpop.permute.xlu0 %495
        %497 = vrot.lane.b32.xlu0 %v490, 96
        %v498 = vpop.permute.xlu0 %497
        %499 = vrot.lane.b32.xlu0 %v491, 96
        %v500 = vpop.permute.xlu0 %499
        %vm501 = vcmask 785408
        %v502 = vsel %vm501, %v496, %v498
        %v503 = vsel %vm501, %v498, %v500
        %506 = vst [vmem:[#allocation2 + $0x60] sm:$0xff] %v502
        %507 = vst [vmem:[#allocation2 + $0x68] sm:$0xff] %v503
        %v508 = vld [vmem:[%s285] sm:$0xff]
        %v509 = vld [vmem:[%s285 + $0x8] sm:$0xff]
        %v510 = vld [vmem:[%s285 + $0x10] sm:$0xff]
        %514 = vrot.lane.b32.xlu0 %v508, 95
        %v515 = vpop.permute.xlu0 %514
        %516 = vrot.lane.b32.xlu0 %v509, 95
        %v517 = vpop.permute.xlu0 %516
        %518 = vrot.lane.b32.xlu0 %v510, 95
        %v519 = vpop.permute.xlu0 %518
        %vm520 = vcmask 777216
        %v521 = vsel %vm520, %v515, %v517
        %v522 = vsel %vm520, %v517, %v519
        %525 = vst [vmem:[#allocation2 + $0x70] sm:$0xff] %v521
        %526 = vst [vmem:[#allocation2 + $0x78] sm:$0xff] %v522
        %v527 = vld [vmem:[%s285] sm:$0xff]
        %v528 = vld [vmem:[%s285 + $0x8] sm:$0xff]
        %v529 = vld [vmem:[%s285 + $0x10] sm:$0xff]
        %v530 = vld [vmem:[%s327] ss:$2 sm:$0x3]
        %v532 = vlaneseq
        %v533 = vshrl.u32 %v532, 7
        %v534 = vsub.s32 0, %v533
        %v535 = vrot.slane %v530, %v534
        %v536 = vlaneseq
        %v537 = vshrl.u32 %v536, 7
        %v538 = vsub.s32 1, %v537
        %v539 = vrot.slane %v530, %v538
        %540 = vrot.lane.b32.xlu0 %v535, 34
        %v541 = vpop.permute.xlu0 %540
        %542 = vrot.lane.b32.xlu0 %v539, 34
        %v543 = vpop.permute.xlu0 %542
        %vm544 = vcmask 277504
        %v545 = vsel %vm544, %v541, %v543
        %v549 = vmul.f32 %v527, %v541
        %v550 = vmul.f32 %v528, %v545
        %v551 = vmul.f32 %v529, %v543
        %555 = vrot.lane.b32.xlu0 %v549, 94
        %v556 = vpop.permute.xlu0 %555
        %557 = vrot.lane.b32.xlu0 %v550, 94
        %v558 = vpop.permute.xlu0 %557
        %559 = vrot.lane.b32.xlu0 %v551, 94
        %v560 = vpop.permute.xlu0 %559
        %vm561 = vcmask 769024
        %v562 = vsel %vm561, %v556, %v558
        %v563 = vsel %vm561, %v558, %v560
        %566 = vst [vmem:[#allocation2 + $0x80] sm:$0xff] %v562
        %567 = vst [vmem:[#allocation2 + $0x88] sm:$0xff] %v563
        %v568 = vld [vmem:[%s2] sm:$0xff]
        %v569 = vld [vmem:[#allocation2] sm:$0xff]
        %v570 = vld [vmem:[#allocation2 + $0x8] sm:$0xff]
        %v571 = vld [vmem:[#allocation2 + $0x10] sm:$0xff]
        %v572 = vld [vmem:[#allocation2 + $0x18] sm:$0xff]
        %v573 = vld [vmem:[#allocation2 + $0x20] sm:$0xff]
        %v574 = vld [vmem:[#allocation2 + $0x28] sm:$0xff]
        %v575 = vld [vmem:[#allocation2 + $0x30] sm:$0xff]
        %v576 = vld [vmem:[#allocation2 + $0x38] sm:$0xff]
        %v577 = vld [vmem:[#allocation2 + $0x40] sm:$0xff]
        %v578 = vld [vmem:[#allocation2 + $0x48] sm:$0xff]
        %v579 = vld [vmem:[#allocation2 + $0x50] sm:$0xff]
        %v580 = vld [vmem:[#allocation2 + $0x58] sm:$0xff]
        %v581 = vld [vmem:[#allocation2 + $0x60] sm:$0xff]
        %v582 = vld [vmem:[#allocation2 + $0x68] sm:$0xff]
        %v583 = vld [vmem:[#allocation2 + $0x70] sm:$0xff]
        %v584 = vld [vmem:[#allocation2 + $0x78] sm:$0xff]
        %v585 = vld [vmem:[#allocation2 + $0x80] sm:$0xff]
        %v586 = vld [vmem:[#allocation2 + $0x88] sm:$0xff]
        %v587 = vld [vmem:[%s3] sm:$0xff]
        %589 = vset.pattern.permute.xlu0 0
        %590 = vperm.xlu0 %589, %v587
        %v591 = vpop.permute.xlu0 %590
        %vm593 = vcmask 588800
        %v595 = vsel %vm593, %v568, 0
        %597 = vmatprep.subr.mxu0 0.0
        %598 = vmatpush1.msra.mxu0 0.0
        %599 = vmatprep.subr.mxu0 0.0
        %600 = vmatpush1.msra.mxu0 0.0
        %601 = vmatprep.subr.mxu0 0.0
        %602 = vmatpush1.msra.mxu0 0.0
        %603 = vmatprep.subr.mxu0 0.0
        %604 = vmatpush1.msra.mxu0 0.0
        %605 = vmatprep.subr.mxu0 0.0
        %606 = vmatpush1.msra.mxu0 0.0
        %607 = vmatprep.subr.mxu0 0.0
        %608 = vmatpush1.msra.mxu0 0.0
        %609 = vmatprep.subr.mxu0 0.0
        %610 = vmatpush1.msra.mxu0 0.0
        %611 = vmatprep.subr.mxu0 %v586
        %612 = vmatpush1.msra.mxu0 %v585
        %613 = vmatprep.subr.mxu0 %v584
        %614 = vmatpush1.msra.mxu0 %v583
        %615 = vmatprep.subr.mxu0 %v582
        %616 = vmatpush1.msra.mxu0 %v581
        %617 = vmatprep.subr.mxu0 %v580
        %618 = vmatpush1.msra.mxu0 %v579
        %619 = vmatprep.subr.mxu0 %v578
        %620 = vmatpush1.msra.mxu0 %v577
        %621 = vmatprep.subr.mxu0 %v576
        %622 = vmatpush1.msra.mxu0 %v575
        %623 = vmatprep.subr.mxu0 %v574
        %624 = vmatpush1.msra.mxu0 %v573
        %625 = vmatprep.subr.mxu0 %v572
        %626 = vmatpush1.msra.mxu0 %v571
        %627 = vmatprep.subr.mxu0 %v570
        %628 = vmatpush1.msra.mxu0 %v569
        %629 = vmatprep.subr.mxu0 0.0
        %630 = vmatpush2.msra.mxu0 0.0
        %631 = vmatprep.subr.mxu0 0.0
        %632 = vmatpush2.msra.mxu0 0.0
        %633 = vmatprep.subr.mxu0 0.0
        %634 = vmatpush2.msra.mxu0 0.0
        %635 = vmatprep.subr.mxu0 0.0
        %636 = vmatpush2.msra.mxu0 0.0
        %637 = vmatprep.subr.mxu0 0.0
        %638 = vmatpush2.msra.mxu0 0.0
        %639 = vmatprep.subr.mxu0 0.0
        %640 = vmatpush2.msra.mxu0 0.0
        %641 = vmatprep.subr.mxu0 0.0
        %642 = vmatpush2.msra.mxu0 0.0
        %643 = vmatprep.subr.mxu0 0.0
        %644 = vmatpush2.msra.mxu0 0.0
        %645 = vmatprep.subr.mxu0 0.0
        %646 = vmatpush2.msra.mxu0 0.0
        %647 = vmatprep.subr.mxu0 0.0
        %648 = vmatpush2.msra.mxu0 0.0
        %649 = vmatprep.subr.mxu0 0.0
        %650 = vmatpush2.msra.mxu0 0.0
        %651 = vmatprep.subr.mxu0 0.0
        %652 = vmatpush2.msra.mxu0 0.0
        %653 = vmatprep.subr.mxu0 0.0
        %654 = vmatpush2.msra.mxu0 0.0
        %655 = vmatprep.subr.mxu0 0.0
        %656 = vmatpush2.msra.mxu0 0.0
        %657 = vmatprep.subr.mxu0 0.0
        %658 = vmatpush2.msra.mxu0 0.0
        %659 = vmatprep.subr.mxu0 0.0
        %660 = vmatpush2.msra.mxu0 0.0
        %661 = vmatprep.mubr.f32.mxu0 0.0
        %662 = vmatmul.mubr.f32.gmra.mxu0 %v595
        %v663 = vpop.f32.mrf.mxu0
        %v664 = vadd.f32 %v591, %v663
        %v665 = vpop.f32.mrf.mxu0
        %v666 = vadd.f32 %v591, %v665
        %667 = vdwg.mxu0
        %vm668 = vcmp.gt.f32.partialorder %v664, 0.0
        %vm669 = vcmp.gt.f32.partialorder %v666, 0.0
        %v670 = vmul.f32 %v664, 0.1
        %v671 = vmul.f32 %v666, 0.1
        %v672 = vsel %vm668, %v664, %v670
        %v673 = vsel %vm669, %v666, %v671
        %v674 = vld [vmem:[%s4] sm:$0xff]
        %v675 = vld [vmem:[%s4 + $0x8] sm:$0xff]
        %v676 = vld [vmem:[%s4 + $0x10] sm:$0xff]
        %v677 = vld [vmem:[%s5] sm:$0xff]
        %v678 = vld [vmem:[%s5 + $0x8] sm:$0xff]
        %v679 = vld [vmem:[%s5 + $0x10] sm:$0xff]
        %681 = vset.pattern.permute.xlu0 0
        %682 = vperm.xlu0 %681, %v677
        %v683 = vpop.permute.xlu0 %682
        %686 = vset.pattern.permute.xlu0 0
        %687 = vperm.xlu0 %686, %v678
        %v688 = vpop.permute.xlu0 %687
        %691 = vset.pattern.permute.xlu0 0
        %692 = vperm.xlu0 %691, %v679
        %v693 = vpop.permute.xlu0 %692
        %vm695 = vcmask 64512
        %v697 = vsel %vm695, %v674, 0
        %v700 = vsel %vm695, %v675, 0
        %v703 = vsel %vm695, %v676, 0
        %705 = vmatprep.subr.mxu0 0.0
        %706 = vmatpush1.msra.mxu0 0.0
        %707 = vmatprep.subr.mxu0 0.0
        %708 = vmatpush1.msra.mxu0 0.0
        %709 = vmatprep.subr.mxu0 0.0
        %710 = vmatpush1.msra.mxu0 0.0
        %711 = vmatprep.subr.mxu0 0.0
        %712 = vmatpush1.msra.mxu0 0.0
        %713 = vmatprep.subr.mxu0 0.0
        %714 = vmatpush1.msra.mxu0 0.0
        %715 = vmatprep.subr.mxu0 0.0
        %716 = vmatpush1.msra.mxu0 0.0
        %717 = vmatprep.subr.mxu0 0.0
        %718 = vmatpush1.msra.mxu0 0.0
        %719 = vmatprep.subr.mxu0 0.0
        %720 = vmatpush1.msra.mxu0 0.0
        %721 = vmatprep.subr.mxu0 0.0
        %722 = vmatpush1.msra.mxu0 0.0
        %723 = vmatprep.subr.mxu0 0.0
        %724 = vmatpush1.msra.mxu0 0.0
        %725 = vmatprep.subr.mxu0 0.0
        %726 = vmatpush1.msra.mxu0 0.0
        %727 = vmatprep.subr.mxu0 0.0
        %728 = vmatpush1.msra.mxu0 0.0
        %729 = vmatprep.subr.mxu0 0.0
        %730 = vmatpush1.msra.mxu0 0.0
        %731 = vmatprep.subr.mxu0 0.0
        %732 = vmatpush1.msra.mxu0 0.0
        %733 = vmatprep.subr.mxu0 0.0
        %734 = vmatpush1.msra.mxu0 0.0
        %735 = vmatprep.subr.mxu0 %v673
        %736 = vmatpush1.msra.mxu0 %v672
        %737 = vmatprep.subr.mxu0 0.0
        %738 = vmatpush2.msra.mxu0 0.0
        %739 = vmatprep.subr.mxu0 0.0
        %740 = vmatpush2.msra.mxu0 0.0
        %741 = vmatprep.subr.mxu0 0.0
        %742 = vmatpush2.msra.mxu0 0.0
        %743 = vmatprep.subr.mxu0 0.0
        %744 = vmatpush2.msra.mxu0 0.0
        %745 = vmatprep.subr.mxu0 0.0
        %746 = vmatpush2.msra.mxu0 0.0
        %747 = vmatprep.subr.mxu0 0.0
        %748 = vmatpush2.msra.mxu0 0.0
        %749 = vmatprep.subr.mxu0 0.0
        %750 = vmatpush2.msra.mxu0 0.0
        %751 = vmatprep.subr.mxu0 0.0
        %752 = vmatpush2.msra.mxu0 0.0
        %753 = vmatprep.subr.mxu0 0.0
        %754 = vmatpush2.msra.mxu0 0.0
        %755 = vmatprep.subr.mxu0 0.0
        %756 = vmatpush2.msra.mxu0 0.0
        %757 = vmatprep.subr.mxu0 0.0
        %758 = vmatpush2.msra.mxu0 0.0
        %759 = vmatprep.subr.mxu0 0.0
        %760 = vmatpush2.msra.mxu0 0.0
        %761 = vmatprep.subr.mxu0 0.0
        %762 = vmatpush2.msra.mxu0 0.0
        %763 = vmatprep.subr.mxu0 0.0
        %764 = vmatpush2.msra.mxu0 0.0
        %765 = vmatprep.subr.mxu0 0.0
        %766 = vmatpush2.msra.mxu0 0.0
        %767 = vmatprep.subr.mxu0 0.0
        %768 = vmatpush2.msra.mxu0 0.0
        %769 = vmatprep.mubr.f32.mxu0 0.0
        %770 = vmatmul.mubr.f32.gmra.mxu0 %v697
        %v771 = vpop.f32.mrf.mxu0
        %v772 = vadd.f32 %v683, %v771
        %v773 = vpop.f32.mrf.mxu0
        %v774 = vadd.f32 %v683, %v773
        %775 = vmatprep.mubr.f32.mxu0 0.0
        %776 = vmatmul.mubr.f32.gmra.mxu0 %v700
        %v777 = vpop.f32.mrf.mxu0
        %v778 = vadd.f32 %v688, %v777
        %v779 = vpop.f32.mrf.mxu0
        %v780 = vadd.f32 %v688, %v779
        %781 = vmatprep.mubr.f32.mxu0 0.0
        %782 = vmatmul.mubr.f32.gmra.mxu0 %v703
        %v783 = vpop.f32.mrf.mxu0
        %v784 = vadd.f32 %v693, %v783
        %v785 = vpop.f32.mrf.mxu0
        %v786 = vadd.f32 %v693, %v785
        %787 = vdwg.mxu0
        %788 = vst [vmem:[%s274] sm:$0xff] %v772
        %789 = vst [vmem:[%s274 + $0x8] sm:$0xff] %v774
        %790 = vst [vmem:[%s274 + $0x10] sm:$0xff] %v778
        %791 = vst [vmem:[%s274 + $0x18] sm:$0xff] %v780
        %792 = vst [vmem:[%s274 + $0x20] sm:$0xff] %v784
        %793 = vst [vmem:[%s274 + $0x28] sm:$0xff] %v786
        %s794 = sand.u32 %s178, 1
        %s795 = scalar_lea.sflag [#allocation4], %s794
        %s796 = sand.u32 %s178, 1
        %s797 = smul.addr %s796, 48
        %s798 = scalar_lea.vmem [#allocation3], %s797
        // Predicated region
        $region45: #{tpu_custom_call.1} parent=43 // pred_check
          %p799 = pneg %p188
        $region46: #{tpu_custom_call.1} parent=43 // pred_check_branch
          %801 = sbr.rel (%p799) target = $region48
        $region47: #{tpu_custom_call.1} parent=43 // pred_region
          %s802 = smul.u32 2, %s25
          %s804 = ssub.s32 768, 768
          %805 = vsyncadd %s795, %s804
          %s806 = smul.addr %s24, 6
          %s807 = sadd.s32 %s802, %s806
          %s808 = smul.addr %s807, 128
          %s809 = scalar_lea.hbm %s6, %s808
          %s810 = sshll.u32 %s798, 4
          %s811 = int_to_ptr.vmem [resolvable:$true] %s810
          %816 = dma.vmem_to_hbm [thread:$0]  %s811, 768, %s809, %s795, 256, 256, 16
        $region48: #{tpu_custom_call.1} parent=43 // pred_fallthru
          _
      $region44: #{tpu_custom_call.1} parent=5 // pred_fallthru
        _
      %p817 = scmp.le.s32.totalorder 2, %s15
      // Predicated region
      $region49: #{tpu_custom_call.1} parent=5 // pred_check
        %p818 = pneg %p817
      $region50: #{tpu_custom_call.1} parent=5 // pred_check_branch
        %820 = sbr.rel (%p818) target = $region52
      $region51: #{tpu_custom_call.1} parent=5 // pred_region
        %s821 = ssub.s32 %s15, 2
        // Predicated region
        $region53: #{tpu_custom_call.1} parent=51 // pred_check
          %p822 = pneg %p194
        $region54: #{tpu_custom_call.1} parent=51 // pred_check_branch
          %824 = sbr.rel (%p822) target = $region56
        $region55: #{tpu_custom_call.1} parent=51 // pred_region
          %s825 = sand.u32 %s179, 1
          %s826 = scalar_lea.sflag [#allocation4], %s825
          %s827 = sand.u32 %s179, 1
          %s828 = smul.addr %s827, 48
          %s829 = scalar_lea.vmem [#allocation3], %s828
          %830 = dma.done %s826, 768
        $region56: #{tpu_custom_call.1} parent=51 // pred_fallthru
          _
      $region52: #{tpu_custom_call.1} parent=5 // pred_fallthru
        _
    $region6: #{tpu_custom_call.1} parent=1 // loop_footer
      %s19 = sadd.s32 1, %s15
    $region7: #{tpu_custom_call.1} parent=1 // loop_footer_branch
      %14 = sbr.rel target = $region3
    $region8: #{tpu_custom_call.1} parent=1 // loop_exit
      _
    %831 = vsyncpa [#allocation4], 1
    %s832 = scalar_lea.sflag [#allocation4], 1
    %833 = vsyncpa %s832, 1

</llo_original>
